<compile_context>
chip_gen: v6e
topology: v6e:2x2x1
jax: 0.10.0
libtpu: 0.0.40
codegen_flags: <defaults>
</compile_context>

<pallas_src>
import functools

import jax
import jax.numpy as jnp
from jax.experimental import pallas as pl
from jax.experimental.pallas import tpu as pltpu

_MiB = 1024 * 1024


def _round_up(x, m):
    return ((x + m - 1) // m) * m


def _tpu_vmem_capacity_bytes():
    """Physical per-TensorCore VMEM, with a conservative (v7x-sized) fallback."""
    try:
        return int(pltpu.get_tpu_info().vmem_capacity_bytes)
    except Exception:
        return 64 * _MiB


def simam_reference(x, e_lambda=1e-3):
    """Pure-JAX reference matching the PyTorch forward exactly."""
    b, c, h, w = x.shape
    n = w * h - 1
    mu = jnp.mean(x, axis=(2, 3), keepdims=True)
    d2 = (x - mu) ** 2
    y = d2 / (4.0 * (jnp.sum(d2, axis=(2, 3), keepdims=True) / n + e_lambda)) + 0.5
    return x * jax.nn.sigmoid(y)


def _simam_kernel(x_ref, o_ref, *, inv_n, e_lambda):
    # x_ref / o_ref: (tile_rows, H*W) in VMEM; one row == one (b, c) channel.
    x = x_ref[...].astype(jnp.float32)

    # Per-row (channel) mean over the spatial axis -> XLU lane reduction.
    mu = jnp.mean(x, axis=-1, keepdims=True)

    # Row sum of (x - mu)^2. The squared difference is NOT kept resident
    # across the reduction; it is recomputed below so only `x` stays live
    # (saves one full-block f32 temporary -> VMEM headroom for larger tiles).
    xm = x - mu
    s = jnp.sum(xm * xm, axis=-1, keepdims=True)

    # denom = 4 * (s / n + e_lambda)  -- per-row scalar column, > 0 here.
    denom = 4.0 * (s * inv_n + e_lambda)
    r = pl.reciprocal(denom, approx=True)        # per-row EUP vrcp (cheap)
    r = r * (2.0 - denom * r)                    # per-row Newton step (~free)

    # y = (x - mu)^2 * r + 0.5   (ephemeral recompute: 2 VALU ops/elem)
    y = jnp.square(x - mu) * r + 0.5

    # sigmoid(y) = 0.5 * (1 + tanh(y / 2)) -> single EUP op per element.
    sig = 0.5 * (1.0 + jnp.tanh(0.5 * y))

    o_ref[...] = (x * sig).astype(o_ref.dtype)


def _pick_tile_rows(rows, hw_pad, itemsize, *, sub, target_block_bytes,
                    min_grid, vmem_budget_bytes):
    """Largest sublane-multiple row tile that hits the streaming-block target
    and fits the VMEM budget, while keeping >= min_grid grid steps when the
    problem is big enough."""
    # Per-row VMEM footprint (lane-padded): 2x double-buffered input blocks +
    # 2x output blocks in the source dtype, plus ~3 full-block f32 temps used
    # by the elementwise chain inside the body.
    per_row_bytes = hw_pad * (4 * itemsize + 3 * 4)

    t_target = target_block_bytes // (hw_pad * itemsize)
    t_vmem = max(vmem_budget_bytes // per_row_bytes, sub)
    t = min(t_target, t_vmem)
    t = (t // sub) * sub
    t = max(t, sub)

    rows_r = _round_up(rows, sub)
    cap = max(sub, (rows_r // min_grid) // sub * sub)
    t = min(t, cap, rows_r)
    return max(t, sub), per_row_bytes


def simam(x, e_lambda=1e-3, tile_rows=None):
    """SimAM forward. x: (B, C, H, W) array (NCHW, same as PyTorch)."""
    b, c, h, w = x.shape
    hw = h * w
    n = hw - 1
    rows = b * c

    # Lane-sparse spatial extents (hw <= 64 means <= 50% lane utilization
    # after padding to 128 lanes) are better served by plain XLA; this also
    # covers the degenerate H = W = 1 (n = 0) case exactly like PyTorch.
    if hw <= 64:
        return simam_reference(x, e_lambda=e_lambda)

    x2d = x.reshape(rows, hw)                        # free reshape, no HBM copy

    itemsize = jnp.dtype(x.dtype).itemsize
    sub = max(8, 32 // itemsize)                     # sublane multiple: f32->8, bf16->16, int8->32
    hw_pad = _round_up(hw, 128)                      # lanes the VMEM tile actually occupies

    vmem_cap = _tpu_vmem_capacity_bytes()
    small_vmem = vmem_cap <= 96 * _MiB               # v7x-like: 64 MiB/TC, ~3.2 TB/s HBM
    target_block_bytes = 5 * _MiB if small_vmem else 2 * _MiB
    min_grid = 4 if small_vmem else 2                # 2 TCs on v7x, 1 on v5e/v6e
    # Scoped-VMEM ceiling with compiler/pipeline headroom, never above physical.
    vmem_cap_limit = min(vmem_cap - vmem_cap // 8, 100 * _MiB)

    if tile_rows is None:
        tile_rows, per_row_bytes = _pick_tile_rows(
            rows, hw_pad, itemsize, sub=sub,
            target_block_bytes=target_block_bytes, min_grid=min_grid,
            vmem_budget_bytes=max(vmem_cap_limit - 4 * _MiB, 8 * _MiB))
    else:
        tile_rows = max(_round_up(tile_rows, sub), sub)
        per_row_bytes = hw_pad * (4 * itemsize + 3 * 4)

    grid = pl.cdiv(rows, tile_rows)                  # partial last block masked by Pallas

    footprint = tile_rows * per_row_bytes + 4 * _MiB
    vmem_limit_bytes = int(min(max(32 * _MiB, footprint), vmem_cap_limit))

    kernel = functools.partial(_simam_kernel, inv_n=1.0 / float(n),
                               e_lambda=float(e_lambda))

    cost = pl.CostEstimate(
        flops=10 * rows * hw,                        # sub/square/mul/add chain
        transcendentals=rows * hw,                   # one tanh per element
        bytes_accessed=2 * rows * hw * itemsize,     # one read + one write
    )

    # TODO(synk): confirm via xprof that the single "parallel" grid axis is
    # sharded across both v7x TensorCores; if not, split rows over a leading
    # CORE_PARALLEL axis.
    out2d = pl.pallas_call(
        kernel,
        out_shape=jax.ShapeDtypeStruct((rows, hw), x.dtype),
        grid_spec=pltpu.PrefetchScalarGridSpec(
            num_scalar_prefetch=0,
            grid=(grid,),
            in_specs=[pl.BlockSpec((tile_rows, hw), lambda i: (i, 0))],
            out_specs=pl.BlockSpec((tile_rows, hw), lambda i: (i, 0)),
        ),
        compiler_params=pltpu.CompilerParams(
            dimension_semantics=("parallel",),
            vmem_limit_bytes=vmem_limit_bytes,
        ),
        cost_estimate=cost,
    )(x2d)

    return out2d.reshape(b, c, h, w)


if __name__ == "__main__":
    # simam_module has no learnable parameters; only e_lambda (default 1e-3).
    key = jax.random.PRNGKey(0)
    B, C, H, W = 2, 4, 16, 16
    x = jax.random.normal(key, (B, C, H, W), dtype=jnp.float32)

    out = simam(x, e_lambda=1e-3)
    out = jax.block_until_ready(out)

    ref = simam_reference(x, e_lambda=1e-3)
    assert out.shape == (B, C, H, W)
    # tanh-based sigmoid + Newton-refined per-row reciprocal keep ~f32 accuracy.
    assert jnp.allclose(out, ref, atol=5e-4, rtol=5e-4), "mismatch vs reference"

    print("KERNEL_OK")
</pallas_src>

<mosaic_0001>
module attributes {stable_mosaic.version = 11 : i64} {
  func.func @_simam_kernel(%arg0: i32, %arg1: memref<8x256xf32, #tpu.memory_space<vmem>>, %arg2: memref<8x256xf32, #tpu.memory_space<vmem>>) attributes {dimension_semantics = [#tpu.dimension_semantics<parallel>], iteration_bounds = array<i64: 1>, scalar_prefetch = 0 : i64, scratch_operands = 0 : i64, tpu.core_type = #tpu.core_type<tc>, window_params = [{transform_indices = @transform_0, window_bounds = array<i64: 8, 256>}, {transform_indices = @transform_1, window_bounds = array<i64: 8, 256>}]} {
    %c0 = arith.constant 0 : index
    %c0_0 = arith.constant 0 : index
    %0 = vector.load %arg1[%c0, %c0_0] : memref<8x256xf32, #tpu.memory_space<vmem>>, vector<8x256xf32>
    %cst = arith.constant dense<0.000000e+00> : vector<8xf32>
    %1 = vector.multi_reduction <add>, %0, %cst [1] : vector<8x256xf32> to vector<8xf32>
    %2 = vector.shape_cast %1 : vector<8xf32> to vector<8x1xf32>
    %cst_1 = arith.constant 2.560000e+02 : f32
    %3 = vector.broadcast %cst_1 : f32 to vector<8x1xf32>
    %4 = arith.divf %2, %3 : vector<8x1xf32>
    %5 = vector.broadcast %4 : vector<8x1xf32> to vector<8x256xf32>
    %6 = arith.subf %0, %5 : vector<8x256xf32>
    %7 = arith.mulf %6, %6 : vector<8x256xf32>
    %cst_2 = arith.constant dense<0.000000e+00> : vector<8xf32>
    %8 = vector.multi_reduction <add>, %7, %cst_2 [1] : vector<8x256xf32> to vector<8xf32>
    %9 = vector.shape_cast %8 : vector<8xf32> to vector<8x1xf32>
    %cst_3 = arith.constant 0.00392156886 : f32
    %10 = vector.broadcast %cst_3 : f32 to vector<8x1xf32>
    %11 = arith.mulf %9, %10 : vector<8x1xf32>
    %cst_4 = arith.constant 1.000000e-03 : f32
    %12 = vector.broadcast %cst_4 : f32 to vector<8x1xf32>
    %13 = arith.addf %11, %12 : vector<8x1xf32>
    %cst_5 = arith.constant 4.000000e+00 : f32
    %14 = vector.broadcast %cst_5 : f32 to vector<8x1xf32>
    %15 = arith.mulf %14, %13 : vector<8x1xf32>
    %16 = tpu.reciprocal %15 {approx = true} : vector<8x1xf32> -> vector<8x1xf32>
    %17 = arith.mulf %15, %16 : vector<8x1xf32>
    %cst_6 = arith.constant 2.000000e+00 : f32
    %18 = vector.broadcast %cst_6 : f32 to vector<8x1xf32>
    %19 = arith.subf %18, %17 : vector<8x1xf32>
    %20 = arith.mulf %16, %19 : vector<8x1xf32>
    %21 = vector.broadcast %4 : vector<8x1xf32> to vector<8x256xf32>
    %22 = arith.subf %0, %21 : vector<8x256xf32>
    %23 = arith.mulf %22, %22 : vector<8x256xf32>
    %24 = vector.broadcast %20 : vector<8x1xf32> to vector<8x256xf32>
    %25 = arith.mulf %23, %24 : vector<8x256xf32>
    %cst_7 = arith.constant 5.000000e-01 : f32
    %26 = vector.broadcast %cst_7 : f32 to vector<8x256xf32>
    %27 = arith.addf %25, %26 : vector<8x256xf32>
    %cst_8 = arith.constant 5.000000e-01 : f32
    %28 = vector.broadcast %cst_8 : f32 to vector<8x256xf32>
    %29 = arith.mulf %28, %27 : vector<8x256xf32>
    %30 = math.tanh %29 : vector<8x256xf32>
    %cst_9 = arith.constant 1.000000e+00 : f32
    %31 = vector.broadcast %cst_9 : f32 to vector<8x256xf32>
    %32 = arith.addf %31, %30 : vector<8x256xf32>
    %cst_10 = arith.constant 5.000000e-01 : f32
    %33 = vector.broadcast %cst_10 : f32 to vector<8x256xf32>
    %34 = arith.mulf %33, %32 : vector<8x256xf32>
    %35 = arith.mulf %0, %34 : vector<8x256xf32>
    %c0_11 = arith.constant 0 : index
    %c0_12 = arith.constant 0 : index
    %36 = vector.load %arg2[%c0_11, %c0_12] : memref<8x256xf32, #tpu.memory_space<vmem>>, vector<8x256xf32>
    tpu.vector_store %arg2[%c0_11, %c0_12], %35 {strides = array<i32>} : memref<8x256xf32, #tpu.memory_space<vmem>>, vector<8x256xf32>,
    return
  }
  func.func @transform_0(%arg0: i32) -> (i32, i32) {
    %c0_i32 = arith.constant 0 : i32
    %c0_i32_0 = arith.constant 0 : i32
    return %arg0, %c0_i32 : i32, i32
  }
  func.func @transform_1(%arg0: i32) -> (i32, i32) {
    %c0_i32 = arith.constant 0 : i32
    %c0_i32_0 = arith.constant 0 : i32
    return %arg0, %c0_i32 : i32, i32
  }
}

</mosaic_0001>

<llo_original>
// kernel: tpu_custom_call.1
$region0: #{tpu_custom_call.1}
  #allocation0 [shape = 'u32[]', space=smem, size = 0x4, offset = 0x4, fixed_abs, tag = 'smem constant byte address 0x4 - core index']
  #allocation1 [shape = 'u32[144,128]{1,0:T(1,128)}', space=vmem, size = 0x12000, scoped, tag = 'internal scratch']
  %s0 = inlined_call_operand.hbm [shape: f32[8,256], index: 0, kind: input, shape index: {}]
  %s1 = inlined_call_operand.hbm [shape: f32[8,256], index: 1, kind: output, shape index: {}]
  %s2 = sld [smem:[#allocation0]]
  $region18: #{tpu_custom_call.1} parent=0
    _
  %s4 = ssub.s32 1, %s2
  %s5 = scalar_select 0, %s4, %s2
  $region1: #{tpu_custom_call.1} parent=0
    #allocation2 [shape = 'u8[8192]{0}', space=vmem, size = 0x2000, scoped, tag = 'input window, operand 0, single buffered']
    #allocation3 [shape = 's32[1]{0}', space=sflag, size = 0x4, scoped, tag = 'scoped memory for tpu_custom_call.1']
    #allocation4 [shape = 's32[1]{0}', space=sflag, size = 0x4, scoped, tag = 'scoped memory for tpu_custom_call.1']
    #allocation5 [shape = 'u8[8192]{0}', space=vmem, size = 0x2000, scoped, tag = 'output window, operand 0, single buffered']
    %6 = vsyncpa [#allocation3], 0
    %7 = vsyncpa [#allocation4], 0
    // Predicated region
    $region2: #{tpu_custom_call.1} parent=1 // pred_check
      _
    $region3: #{tpu_custom_call.1} parent=1 // pred_check_branch
      %9 = sbr.rel (0) target = $region5
    $region4: #{tpu_custom_call.1} parent=1 // pred_region
      %s11 = ssub.s32 256, 256
      %12 = vsyncadd [#allocation3], %s11
      %s14 = sshll.u32 [#allocation2], 4
      %s15 = int_to_ptr.vmem [resolvable:$true] %s14
      %17 = dma.hbm_to_vmem [thread:$0]  %s0, 256, %s15, [#allocation3]
    $region5: #{tpu_custom_call.1} parent=1 // pred_fallthru
      _
    // Predicated region
    $region6: #{tpu_custom_call.1} parent=1 // pred_check
      _
    $region7: #{tpu_custom_call.1} parent=1 // pred_check_branch
      %19 = sbr.rel (0) target = $region9
    $region8: #{tpu_custom_call.1} parent=1 // pred_region
      %20 = dma.done [#allocation3], 256
    $region9: #{tpu_custom_call.1} parent=1 // pred_fallthru
      _
    %v21 = vld [vmem:[#allocation2] sm:$0xff]
    %v22 = vld [vmem:[#allocation2 + $0x8] sm:$0xff]
    %v23 = vadd.f32 %v21, %v22
    %24 = vadd.xlane.f32.xlu0 %v23
    %v25 = vpop.xlane.xlu0 %24
    %v26 = vrcp.pop 256.0
    %v27 = vmul.f32 %v25, %v26
    %v28 = vsub.f32 %v21, %v27
    %v29 = vsub.f32 %v22, %v27
    %v30 = vmul.f32 %v28, %v28
    %v31 = vmul.f32 %v29, %v29
    %v32 = vadd.f32 %v30, %v31
    %33 = vadd.xlane.f32.xlu0 %v32
    %v34 = vpop.xlane.xlu0 %33
    %v35 = vmul.f32 %v34, 0.003921569
    %v36 = vadd.f32 %v35, 0.001
    %v37 = vmul.f32 %v36, 4.0
    %v38 = vrcp.pop %v37
    %v39 = vmul.f32 %v37, %v38
    %v40 = vsub.f32 2.0, %v39
    %v41 = vmul.f32 %v38, %v40
    %v42 = vmul.f32 %v30, %v41
    %v43 = vmul.f32 %v31, %v41
    %v44 = vadd.f32 %v42, 0.5
    %v45 = vadd.f32 %v43, 0.5
    %v46 = vmul.f32 %v44, 0.5
    %v47 = vmul.f32 %v45, 0.5
    %v48 = vtanh.pop %v46
    %v49 = vtanh.pop %v47
    %v50 = vadd.f32 %v48, 1.0
    %v51 = vadd.f32 %v49, 1.0
    %v52 = vmul.f32 %v50, 0.5
    %v53 = vmul.f32 %v51, 0.5
    %v54 = vmul.f32 %v21, %v52
    %v55 = vmul.f32 %v22, %v53
    %56 = vst [vmem:[#allocation5] sm:$0xff] %v54
    %57 = vst [vmem:[#allocation5 + $0x8] sm:$0xff] %v55
    // Predicated region
    $region10: #{tpu_custom_call.1} parent=1 // pred_check
      _
    $region11: #{tpu_custom_call.1} parent=1 // pred_check_branch
      %59 = sbr.rel (0) target = $region13
    $region12: #{tpu_custom_call.1} parent=1 // pred_region
      %s61 = ssub.s32 256, 256
      %62 = vsyncadd [#allocation4], %s61
      %s64 = sshll.u32 [#allocation5], 4
      %s65 = int_to_ptr.vmem [resolvable:$true] %s64
      %67 = dma.vmem_to_hbm [thread:$0]  %s65, 256, %s1, [#allocation4]
    $region13: #{tpu_custom_call.1} parent=1 // pred_fallthru
      _
    // Predicated region
    $region14: #{tpu_custom_call.1} parent=1 // pred_check
      _
    $region15: #{tpu_custom_call.1} parent=1 // pred_check_branch
      %69 = sbr.rel (0) target = $region17
    $region16: #{tpu_custom_call.1} parent=1 // pred_region
      %70 = dma.done [#allocation4], 256
    $region17: #{tpu_custom_call.1} parent=1 // pred_fallthru
      _
    %71 = vsyncpa [#allocation3], 1
    %72 = vsyncpa [#allocation4], 1

</llo_original>
